<compile_context>
chip_gen: v7x
topology: tpu7x:2x2x1
jax: 0.10.0
libtpu: 0.0.40
codegen_flags: <defaults>
</compile_context>

<pallas_src>
import functools
import numpy as np
import jax
import jax.numpy as jnp
from jax.experimental import pallas as pl
from jax.experimental.pallas import tpu as pltpu


_LANES = 128  # vreg lane width; keep the minor dim a multiple of this


# ----------------------------------------------------------------------------- kernels
def _mse_default_kernel(pred_ref, target_ref, out_sq_ref, out_cnt_ref, *, min_depth):
    """mask = target > min_depth computed in-kernel (no extra HBM stream)."""
    pred = pred_ref[...]                              # (tile_r, 128) f32
    target = target_ref[...]                          # (tile_r, 128) f32
    valid = target > min_depth
    diff = jnp.where(valid, pred - target, 0.0)
    sq = diff * diff
    cnt = jnp.where(valid, 1.0, 0.0)
    tile_r = pred.shape[0]
    # Fold sublane groups (no lane movement) and reduce across vregs on the VPU.
    out_sq_ref[...] = jnp.sum(sq.reshape(tile_r // 8, 8, _LANES), axis=0)    # (8, 128)
    out_cnt_ref[...] = jnp.sum(cnt.reshape(tile_r // 8, 8, _LANES), axis=0)  # (8, 128)


def _mse_explicit_mask_kernel(pred_ref, target_ref, mask_ref, out_sq_ref, out_cnt_ref):
    """Explicit user-provided mask (0/1 float32), min_depth filter not applied."""
    pred = pred_ref[...]
    target = target_ref[...]
    m = mask_ref[...]
    diff = (pred - target) * m
    sq = diff * diff
    tile_r = pred.shape[0]
    out_sq_ref[...] = jnp.sum(sq.reshape(tile_r // 8, 8, _LANES), axis=0)
    out_cnt_ref[...] = jnp.sum(m.reshape(tile_r // 8, 8, _LANES), axis=0)


# ----------------------------------------------------------------------------- wrapper
def mse_loss(pred, target, mask=None, interpolate=False, min_depth=0.001):
    """pred/target: any shape (e.g. NCHW (B,1,H,W)); mask: optional bool array, same shape."""
    pred_f = jnp.asarray(pred, jnp.float32).reshape(-1)
    target_f = jnp.asarray(target, jnp.float32).reshape(-1)
    n = pred_f.shape[0]

    # Lane-dense 2D layout: (padded_rows, 128), row tiles of up to 1024 sublanes.
    rows = -(-n // _LANES)
    tile_r = min(1024, max(8, ((rows + 7) // 8) * 8))
    padded_rows = -(-rows // tile_r) * tile_r if rows > 0 else tile_r
    padded_n = padded_rows * _LANES
    g = padded_rows // tile_r

    def to2d(x_flat, fill):
        x_flat = jnp.pad(x_flat, (0, padded_n - n), constant_values=fill)
        return x_flat.reshape(padded_rows, _LANES)

    pred2 = to2d(pred_f, 0.0)
    # Padded target rows are 0 <= min_depth -> excluded by the in-kernel mask.
    target2 = to2d(target_f, 0.0)

    if mask is None:
        kernel = functools.partial(_mse_default_kernel, min_depth=float(min_depth))
        inputs = (pred2, target2)
    else:
        mask_f = jnp.asarray(mask, jnp.float32).reshape(-1)
        inputs = (pred2, target2, to2d(mask_f, 0.0))  # padded mask = 0 -> excluded
        kernel = _mse_explicit_mask_kernel

    in_specs = [pl.BlockSpec((tile_r, _LANES), lambda i: (i, 0)) for _ in inputs]

    out_sq, out_cnt = pl.pallas_call(
        kernel,
        out_shape=(
            jax.ShapeDtypeStruct((8 * g, _LANES), jnp.float32),
            jax.ShapeDtypeStruct((8 * g, _LANES), jnp.float32),
        ),
        grid=(g,),
        in_specs=in_specs,
        out_specs=(
            pl.BlockSpec((8, _LANES), lambda i: (i, 0)),
            pl.BlockSpec((8, _LANES), lambda i: (i, 0)),
        ),
        compiler_params=pltpu.CompilerParams(
            # Per-step independent output blocks -> grid can shard across TCs (v7x megacore).
            dimension_semantics=("parallel",),
            vmem_limit_bytes=32 * 1024 * 1024,  # explicit, safe on v5e/v6e/v7x; tiles use ~3 MiB
        ),
    )(*inputs)

    # Tiny final reduction in plain JAX.
    total_sq = jnp.sum(out_sq)
    count = jnp.sum(out_cnt)
    return total_sq / count  # 0/0 -> nan, matching torch.mean over an empty selection


# ----------------------------------------------------------------------------- main
if __name__ == "__main__":
    key = jax.random.PRNGKey(0)
    B, C, H, W = 2, 1, 16, 16
    k1, k2, k3 = jax.random.split(key, 3)
    pred = jax.random.uniform(k1, (B, C, H, W), jnp.float32, minval=0.0, maxval=10.0)
    # Include sub-min_depth / negative targets so the default mask actually filters.
    target = jax.random.uniform(k2, (B, C, H, W), jnp.float32, minval=-1.0, maxval=10.0)

    # default path: mask = target > min_depth
    loss = jax.block_until_ready(mse_loss(pred, target))
    p = np.asarray(pred, dtype=np.float64)
    t = np.asarray(target, dtype=np.float64)
    m = t > 0.001
    ref = np.mean((p[m] - t[m]) ** 2)
    assert np.allclose(np.asarray(loss), np.float32(ref), rtol=1e-4, atol=1e-6), (float(loss), float(ref))

    # explicit mask path
    emask = jax.random.uniform(k3, (B, C, H, W)) > 0.3
    loss_m = jax.block_until_ready(mse_loss(pred, target, mask=emask))
    em = np.asarray(emask)
    ref_m = np.mean((p[em] - t[em]) ** 2)
    assert np.allclose(np.asarray(loss_m), np.float32(ref_m), rtol=1e-4, atol=1e-6), (float(loss_m), float(ref_m))

    print("KERNEL_OK")
</pallas_src>

<mosaic_0001>
module attributes {stable_mosaic.version = 11 : i64} {
  func.func @_mse_default_kernel(%arg0: i32, %arg1: memref<8x128xf32, #tpu.memory_space<vmem>>, %arg2: memref<8x128xf32, #tpu.memory_space<vmem>>, %arg3: memref<8x128xf32, #tpu.memory_space<vmem>>, %arg4: memref<8x128xf32, #tpu.memory_space<vmem>>) attributes {dimension_semantics = [#tpu.dimension_semantics<parallel>], iteration_bounds = array<i64: 1>, scalar_prefetch = 0 : i64, scratch_operands = 0 : i64, tpu.core_type = #tpu.core_type<tc>, window_params = [{transform_indices = @transform_0, window_bounds = array<i64: 8, 128>}, {transform_indices = @transform_1, window_bounds = array<i64: 8, 128>}, {transform_indices = @transform_2, window_bounds = array<i64: 8, 128>}, {transform_indices = @transform_3, window_bounds = array<i64: 8, 128>}]} {
    %c0 = arith.constant 0 : index
    %c0_0 = arith.constant 0 : index
    %0 = vector.load %arg1[%c0, %c0_0] : memref<8x128xf32, #tpu.memory_space<vmem>>, vector<8x128xf32>
    %c0_1 = arith.constant 0 : index
    %c0_2 = arith.constant 0 : index
    %1 = vector.load %arg2[%c0_1, %c0_2] : memref<8x128xf32, #tpu.memory_space<vmem>>, vector<8x128xf32>
    %cst = arith.constant 1.000000e-03 : f32
    %2 = vector.broadcast %cst : f32 to vector<8x128xf32>
    %3 = arith.cmpf ogt, %1, %2 : vector<8x128xf32>
    %4 = arith.subf %0, %1 : vector<8x128xf32>
    %cst_3 = arith.constant 0.000000e+00 : f32
    %5 = vector.broadcast %cst_3 : f32 to vector<8x128xf32>
    %6 = arith.select %3, %4, %5 : vector<8x128xi1>, vector<8x128xf32>
    %7 = arith.mulf %6, %6 : vector<8x128xf32>
    %cst_4 = arith.constant 1.000000e+00 : f32
    %cst_5 = arith.constant 0.000000e+00 : f32
    %8 = vector.broadcast %cst_4 : f32 to vector<8x128xf32>
    %9 = vector.broadcast %cst_5 : f32 to vector<8x128xf32>
    %10 = arith.select %3, %8, %9 : vector<8x128xi1>, vector<8x128xf32>
    %11 = vector.shape_cast %7 : vector<8x128xf32> to vector<1x8x128xf32>
    %cst_6 = arith.constant dense<0.000000e+00> : vector<8x128xf32>
    %12 = vector.multi_reduction <add>, %11, %cst_6 [0] : vector<1x8x128xf32> to vector<8x128xf32>
    %c0_7 = arith.constant 0 : index
    %c0_8 = arith.constant 0 : index
    %13 = vector.load %arg3[%c0_7, %c0_8] : memref<8x128xf32, #tpu.memory_space<vmem>>, vector<8x128xf32>
    tpu.vector_store %arg3[%c0_7, %c0_8], %12 {strides = array<i32>} : memref<8x128xf32, #tpu.memory_space<vmem>>, vector<8x128xf32>,
    %14 = vector.shape_cast %10 : vector<8x128xf32> to vector<1x8x128xf32>
    %cst_9 = arith.constant dense<0.000000e+00> : vector<8x128xf32>
    %15 = vector.multi_reduction <add>, %14, %cst_9 [0] : vector<1x8x128xf32> to vector<8x128xf32>
    %c0_10 = arith.constant 0 : index
    %c0_11 = arith.constant 0 : index
    %16 = vector.load %arg4[%c0_10, %c0_11] : memref<8x128xf32, #tpu.memory_space<vmem>>, vector<8x128xf32>
    tpu.vector_store %arg4[%c0_10, %c0_11], %15 {strides = array<i32>} : memref<8x128xf32, #tpu.memory_space<vmem>>, vector<8x128xf32>,
    return
  }
  func.func @transform_0(%arg0: i32) -> (i32, i32) {
    %c0_i32 = arith.constant 0 : i32
    %c0_i32_0 = arith.constant 0 : i32
    return %arg0, %c0_i32 : i32, i32
  }
  func.func @transform_1(%arg0: i32) -> (i32, i32) {
    %c0_i32 = arith.constant 0 : i32
    %c0_i32_0 = arith.constant 0 : i32
    return %arg0, %c0_i32 : i32, i32
  }
  func.func @transform_2(%arg0: i32) -> (i32, i32) {
    %c0_i32 = arith.constant 0 : i32
    %c0_i32_0 = arith.constant 0 : i32
    return %arg0, %c0_i32 : i32, i32
  }
  func.func @transform_3(%arg0: i32) -> (i32, i32) {
    %c0_i32 = arith.constant 0 : i32
    %c0_i32_0 = arith.constant 0 : i32
    return %arg0, %c0_i32 : i32, i32
  }
}

</mosaic_0001>

<llo_original>
// kernel: tpu_custom_call.1
$region0: #{tpu_custom_call.1}
  #allocation0 [shape = 'u32[]', space=smem, size = 0x4, offset = 0x4, fixed_abs, tag = 'smem constant byte address 0x4 - core index']
  #allocation1 [shape = 'u32[144,128]{1,0:T(1,128)}', space=vmem, size = 0x12000, scoped, tag = 'internal scratch']
  %s0 = inlined_call_operand.hbm [shape: f32[8,128], index: 0, kind: input, shape index: {}]
  %s1 = inlined_call_operand.hbm [shape: f32[8,128], index: 1, kind: input, shape index: {}]
  %s2 = inlined_call_operand.hbm [shape: f32[8,128], index: 2, kind: output, shape index: {0}]
  %s3 = inlined_call_operand.hbm [shape: f32[8,128], index: 3, kind: output, shape index: {1}]
  %4 = xla_tuple %s2, %s3
  %s5 = sld [smem:[#allocation0]]
  $region34: #{tpu_custom_call.1} parent=0
    _
  %s7 = ssub.s32 1, %s5
  %s8 = scalar_select 0, %s7, %s5
  $region1: #{tpu_custom_call.1} parent=0
    #allocation2 [shape = 'u8[4096]{0}', space=vmem, size = 0x1000, scoped, tag = 'input window, operand 0, single buffered']
    #allocation3 [shape = 's32[1]{0}', space=sflag, size = 0x4, scoped, tag = 'scoped memory for tpu_custom_call.1']
    #allocation4 [shape = 's32[1]{0}', space=sflag, size = 0x4, scoped, tag = 'scoped memory for tpu_custom_call.1']
    #allocation5 [shape = 'u8[4096]{0}', space=vmem, size = 0x1000, scoped, tag = 'input window, operand 1, single buffered']
    #allocation6 [shape = 's32[1]{0}', space=sflag, size = 0x4, scoped, tag = 'scoped memory for tpu_custom_call.1']
    #allocation7 [shape = 'u8[4096]{0}', space=vmem, size = 0x1000, scoped, tag = 'output window, operand 0, single buffered']
    #allocation8 [shape = 'u8[4096]{0}', space=vmem, size = 0x1000, scoped, tag = 'output window, operand 1, single buffered']
    #allocation9 [shape = 's32[1]{0}', space=sflag, size = 0x4, scoped, tag = 'scoped memory for tpu_custom_call.1']
    %9 = vsyncpa [#allocation3], 0
    %10 = vsyncpa [#allocation6], 0
    %11 = vsyncpa [#allocation4], 0
    %12 = vsyncpa [#allocation9], 0
    // Predicated region
    $region2: #{tpu_custom_call.1} parent=1 // pred_check
      _
    $region3: #{tpu_custom_call.1} parent=1 // pred_check_branch
      %14 = sbr.rel (0) target = $region5
    $region4: #{tpu_custom_call.1} parent=1 // pred_region
      %s16 = ssub.s32 128, 128
      %17 = vsyncadd [#allocation3], %s16
      %s19 = sshll.u32 [#allocation2], 4
      %s20 = int_to_ptr.vmem [resolvable:$true] %s19
      %22 = dma.hbm_to_vmem [thread:$0]  %s0, 128, %s20, [#allocation3]
    $region5: #{tpu_custom_call.1} parent=1 // pred_fallthru
      _
    // Predicated region
    $region6: #{tpu_custom_call.1} parent=1 // pred_check
      _
    $region7: #{tpu_custom_call.1} parent=1 // pred_check_branch
      %24 = sbr.rel (0) target = $region9
    $region8: #{tpu_custom_call.1} parent=1 // pred_region
      %s26 = ssub.s32 128, 128
      %27 = vsyncadd [#allocation6], %s26
      %s29 = sshll.u32 [#allocation5], 4
      %s30 = int_to_ptr.vmem [resolvable:$true] %s29
      %32 = dma.hbm_to_vmem [thread:$0]  %s1, 128, %s30, [#allocation6]
    $region9: #{tpu_custom_call.1} parent=1 // pred_fallthru
      _
    // Predicated region
    $region10: #{tpu_custom_call.1} parent=1 // pred_check
      _
    $region11: #{tpu_custom_call.1} parent=1 // pred_check_branch
      %34 = sbr.rel (0) target = $region13
    $region12: #{tpu_custom_call.1} parent=1 // pred_region
      %35 = dma.done [#allocation3], 128
    $region13: #{tpu_custom_call.1} parent=1 // pred_fallthru
      _
    // Predicated region
    $region14: #{tpu_custom_call.1} parent=1 // pred_check
      _
    $region15: #{tpu_custom_call.1} parent=1 // pred_check_branch
      %37 = sbr.rel (0) target = $region17
    $region16: #{tpu_custom_call.1} parent=1 // pred_region
      %38 = dma.done [#allocation6], 128
    $region17: #{tpu_custom_call.1} parent=1 // pred_fallthru
      _
    %v39 = vld [vmem:[#allocation2] sm:$0xff]
    %v40 = vld [vmem:[#allocation5] sm:$0xff]
    %vm41 = vcmp.gt.f32.partialorder %v40, 0.001
    %v42 = vsub.f32 %v39, %v40
    %v43 = vsel %vm41, %v42, 0.0
    %v44 = vmul.f32 %v43, %v43
    %v45 = vsel %vm41, 1.0, 0.0
    %v46 = vadd.f32 %v44, 0.0
    %47 = vst [vmem:[#allocation7] sm:$0xff] %v46
    %v48 = vadd.f32 %v45, 0.0
    %49 = vst [vmem:[#allocation8] sm:$0xff] %v48
    // Predicated region
    $region18: #{tpu_custom_call.1} parent=1 // pred_check
      _
    $region19: #{tpu_custom_call.1} parent=1 // pred_check_branch
      %51 = sbr.rel (0) target = $region21
    $region20: #{tpu_custom_call.1} parent=1 // pred_region
      %s53 = ssub.s32 128, 128
      %54 = vsyncadd [#allocation4], %s53
      %s56 = sshll.u32 [#allocation7], 4
      %s57 = int_to_ptr.vmem [resolvable:$true] %s56
      %59 = dma.vmem_to_hbm [thread:$0]  %s57, 128, %s2, [#allocation4]
    $region21: #{tpu_custom_call.1} parent=1 // pred_fallthru
      _
    // Predicated region
    $region22: #{tpu_custom_call.1} parent=1 // pred_check
      _
    $region23: #{tpu_custom_call.1} parent=1 // pred_check_branch
      %61 = sbr.rel (0) target = $region25
    $region24: #{tpu_custom_call.1} parent=1 // pred_region
      %s63 = ssub.s32 128, 128
      %64 = vsyncadd [#allocation9], %s63
      %s66 = sshll.u32 [#allocation8], 4
      %s67 = int_to_ptr.vmem [resolvable:$true] %s66
      %69 = dma.vmem_to_hbm [thread:$0]  %s67, 128, %s3, [#allocation9]
    $region25: #{tpu_custom_call.1} parent=1 // pred_fallthru
      _
    // Predicated region
    $region26: #{tpu_custom_call.1} parent=1 // pred_check
      _
    $region27: #{tpu_custom_call.1} parent=1 // pred_check_branch
      %71 = sbr.rel (0) target = $region29
    $region28: #{tpu_custom_call.1} parent=1 // pred_region
      %72 = dma.done [#allocation4], 128
    $region29: #{tpu_custom_call.1} parent=1 // pred_fallthru
      _
    // Predicated region
    $region30: #{tpu_custom_call.1} parent=1 // pred_check
      _
    $region31: #{tpu_custom_call.1} parent=1 // pred_check_branch
      %74 = sbr.rel (0) target = $region33
    $region32: #{tpu_custom_call.1} parent=1 // pred_region
      %75 = dma.done [#allocation9], 128
    $region33: #{tpu_custom_call.1} parent=1 // pred_fallthru
      _
    %76 = vsyncpa [#allocation3], 1
    %77 = vsyncpa [#allocation6], 1
    %78 = vsyncpa [#allocation4], 1
    %79 = vsyncpa [#allocation9], 1

</llo_original>
